<compile_context>
chip_gen: v7x
topology: tpu7x:2x2x1
jax: 0.10.0
libtpu: 0.0.40
codegen_flags: <defaults>
</compile_context>

<pallas_src>
import functools
import math

import jax
import jax.numpy as jnp
from jax.experimental import pallas as pl
from jax.experimental.pallas import tpu as pltpu


def _label_smoothing_kernel(x_ref, t_ref, out_ref, *, low, conf, const_row,
                            padding_idx, temperature, n_rows):
    i = pl.program_id(0)
    tm = x_ref.shape[0]

    # (TM, C) logits -> f32, scaled by temperature (matches x * self.temperature).
    x = x_ref[...].astype(jnp.float32)
    if temperature != 1.0:
        x = x * jnp.float32(temperature)

    # Numerically-stable log-sum-exp along the class (lane) axis.
    m = jnp.max(x, axis=-1, keepdims=True)
    e = jnp.exp(x - m)
    lse = m + jnp.log(jnp.sum(e, axis=-1, keepdims=True))          # (TM, 1)

    tgt = t_ref[...]                                                # (TM, 1) int32
    ignore = tgt == padding_idx
    tgt = jnp.where(ignore, 0, tgt)                                 # masked_fill(ignore, 0)

    # sum_c td*logp = low*sum_c x + (conf-low)*x[tgt] - lse  (td sums to 1,
    # never materialized).
    class_iota = jax.lax.broadcasted_iota(jnp.int32, x.shape, dimension=1)
    x_tgt = jnp.sum(jnp.where(class_iota == tgt, x, 0.0), axis=-1, keepdims=True)
    x_sum = jnp.sum(x, axis=-1, keepdims=True)
    dot = jnp.float32(low) * x_sum + jnp.float32(conf - low) * x_tgt - lse

    # Row validity: not padding AND a real (in-bounds) row of the flattened input.
    row_iota = jax.lax.broadcasted_iota(jnp.int32, (tm, 1), dimension=0)
    in_bounds = (i * tm + row_iota) < n_rows
    valid = jnp.logical_and(jnp.logical_not(ignore), in_bounds)

    kl_rows = jnp.where(valid, jnp.float32(const_row) - dot, 0.0)   # (TM, 1)

    # Per-block partials: [sum(kl), non-padding count] in sublane 0 of a (1,8,2)
    # aligned output block; remaining sublanes are zero so the wrapper can do a
    # single full-array sum.
    kl_sum = jnp.sum(kl_rows, axis=0, keepdims=True)                # (1, 1)
    cnt = jnp.sum(valid.astype(jnp.float32), axis=0, keepdims=True)  # (1, 1)

    lane_iota = jax.lax.broadcasted_iota(jnp.int32, (1, 1, 2), dimension=2)
    vals = jnp.where(lane_iota == 0, kl_sum[None], cnt[None])       # (1, 1, 2)
    sub_iota = jax.lax.broadcasted_iota(jnp.int32, (1, 8, 2), dimension=1)
    out_ref[...] = jnp.where(sub_iota == 0, vals, 0.0)              # (1, 8, 2)


def _vmem_capacity_bytes():
    try:
        return int(pltpu.get_tpu_info().vmem_capacity_bytes)
    except Exception:
        return 64 << 20   # conservative (v7x per-TensorCore VMEM)


def _auto_row_tile(n_rows, size, itemsize, align, vmem_cap):
    # Steady-state VMEM bytes per tile row:
    #   2x double-buffered x block + 2x lane-padded (row,1) int32 target block
    #   + ~5 full-tile f32 intermediates inside the body.
    per_row = 2 * size * itemsize + 2 * 128 * 4 + 5 * size * 4
    budget = min(int(vmem_cap * 0.55), 72 << 20) - (4 << 20)
    cap = max(align, budget // per_row)
    # Keep each x DMA block <= ~16 MiB and bound the tile length.
    cap = min(cap, max(align, (16 << 20) // (size * itemsize)), 8192)
    cap = max(align, (cap // align) * align)
    needed = ((n_rows + align - 1) // align) * align
    return min(cap, needed)


def label_smoothing_loss(x, target, *, size, padding_idx, smoothing,
                         normalize_length=False, temperature=1.0,
                         row_tile=None):
    """x: (batch, seqlen, size) float; target: (batch, seqlen) int."""
    assert x.shape[-1] == size
    batch_size = x.shape[0]

    x2 = x.reshape(-1, size)                        # (N, C)
    t2 = target.reshape(-1, 1).astype(jnp.int32)    # (N, 1)
    n_rows = x2.shape[0]

    itemsize = jnp.dtype(x2.dtype).itemsize
    align = 8 if itemsize >= 4 else (16 if itemsize == 2 else 32)
    vmem_cap = _vmem_capacity_bytes()

    if row_tile is None:
        row_tile = _auto_row_tile(n_rows, size, itemsize, align, vmem_cap)
    else:
        row_tile = max(align, (int(row_tile) // align) * align)
        row_tile = min(row_tile, ((n_rows + align - 1) // align) * align)

    n_blocks = (n_rows + row_tile - 1) // row_tile

    low = smoothing / (size - 1)
    conf = 1.0 - smoothing
    # sum_c td*log(td) for a non-padding row, with 0*log(0) := 0.
    const_row = 0.0
    if conf > 0.0:
        const_row += conf * math.log(conf)
    if low > 0.0:
        const_row += (size - 1) * low * math.log(low)

    kernel = functools.partial(
        _label_smoothing_kernel,
        low=float(low), conf=float(conf), const_row=float(const_row),
        padding_idx=int(padding_idx), temperature=float(temperature),
        n_rows=int(n_rows))

    # Generation-aware scoped-VMEM limit (<= ~60% of physical VMEM).
    work = row_tile * (2 * size * itemsize + 2 * 128 * 4 + 5 * size * 4) + (4 << 20)
    vmem_limit = int(max(32 << 20, min(work, int(vmem_cap * 0.6))))

    partials = pl.pallas_call(
        kernel,
        out_shape=jax.ShapeDtypeStruct((n_blocks, 8, 2), jnp.float32),
        grid_spec=pltpu.PrefetchScalarGridSpec(
            num_scalar_prefetch=0,
            grid=(n_blocks,),
            in_specs=[
                pl.BlockSpec((row_tile, size), lambda i: (i, 0)),
                pl.BlockSpec((row_tile, 1), lambda i: (i, 0)),
            ],
            out_specs=pl.BlockSpec((1, 8, 2), lambda i: (i, 0, 0)),
        ),
        compiler_params=pltpu.CompilerParams(
            dimension_semantics=("parallel",),
            vmem_limit_bytes=vmem_limit),
    )(x2, t2)

    totals = jnp.sum(partials, axis=(0, 1))       # (2,): [kl_sum, token_count]
    kl_sum = totals[0]
    total = totals[1]                             # non-padding token count (fused)
    denom = total if normalize_length else jnp.float32(batch_size)
    return kl_sum / denom


def _reference(x, target, *, size, padding_idx, smoothing,
               normalize_length=False, temperature=1.0):
    batch_size = x.shape[0]
    x2 = x.reshape(-1, size).astype(jnp.float32)
    t = target.reshape(-1)
    ignore = t == padding_idx
    t = jnp.where(ignore, 0, t)
    low = smoothing / (size - 1)
    conf = 1.0 - smoothing
    td = jnp.full_like(x2, low).at[jnp.arange(x2.shape[0]), t].set(conf)
    logp = jax.nn.log_softmax(x2 * temperature, axis=1)
    kl = td * (jnp.log(td) - logp)
    kl = jnp.where(ignore[:, None], 0.0, kl)
    total = jnp.sum(~ignore).astype(jnp.float32)
    denom = total if normalize_length else float(batch_size)
    return jnp.sum(kl) / denom


if __name__ == "__main__":
    key = jax.random.PRNGKey(0)
    padding_idx = -1
    smoothing = 0.1
    num_classes = 128

    # Case 1: divisible rows, normalize by batch size, T=1.
    batch, seqlen = 2, 8
    kx, kt = jax.random.split(key)
    x = jax.random.normal(kx, (batch, seqlen, num_classes), dtype=jnp.float32)
    target = jax.random.randint(kt, (batch, seqlen), 0, num_classes,
                                dtype=jnp.int32)
    target = target.at[0, 6].set(padding_idx)
    target = target.at[1, 7].set(padding_idx)

    loss = label_smoothing_loss(
        x, target, size=num_classes, padding_idx=padding_idx,
        smoothing=smoothing, normalize_length=False, temperature=1.0)
    loss = jax.block_until_ready(loss)
    ref = _reference(
        x, target, size=num_classes, padding_idx=padding_idx,
        smoothing=smoothing, normalize_length=False, temperature=1.0)
    assert jnp.allclose(loss, ref, rtol=1e-4, atol=1e-4), (loss, ref)

    # Case 2: non-divisible rows (partial last block / row masking path),
    # normalize by token count, T != 1.
    batch2, seqlen2 = 2, 7
    kx2, kt2 = jax.random.split(kt)
    x2 = jax.random.normal(kx2, (batch2, seqlen2, num_classes),
                           dtype=jnp.float32)
    target2 = jax.random.randint(kt2, (batch2, seqlen2), 0, num_classes,
                                 dtype=jnp.int32)
    target2 = target2.at[1, 0].set(padding_idx)

    loss2 = label_smoothing_loss(
        x2, target2, size=num_classes, padding_idx=padding_idx,
        smoothing=smoothing, normalize_length=True, temperature=2.0)
    loss2 = jax.block_until_ready(loss2)
    ref2 = _reference(
        x2, target2, size=num_classes, padding_idx=padding_idx,
        smoothing=smoothing, normalize_length=True, temperature=2.0)
    assert jnp.allclose(loss2, ref2, rtol=1e-4, atol=1e-4), (loss2, ref2)

    print("KERNEL_OK")
</pallas_src>

<mosaic_0001>
module attributes {stable_mosaic.version = 11 : i64} {
  func.func @_label_smoothing_kernel(%arg0: i32, %arg1: memref<16x128xf32, #tpu.memory_space<vmem>>, %arg2: memref<16x1xi32, #tpu.memory_space<vmem>>, %arg3: memref<1x8x2xf32, #tpu.memory_space<vmem>>) attributes {dimension_semantics = [#tpu.dimension_semantics<parallel>], iteration_bounds = array<i64: 1>, scalar_prefetch = 0 : i64, scratch_operands = 0 : i64, tpu.core_type = #tpu.core_type<tc>, window_params = [{transform_indices = @transform_0, window_bounds = array<i64: 16, 128>}, {transform_indices = @transform_1, window_bounds = array<i64: 16, 1>}, {transform_indices = @transform_2, window_bounds = array<i64: 1, 8, 2>}]} {
    %c0 = arith.constant 0 : index
    %c0_0 = arith.constant 0 : index
    %0 = vector.load %arg1[%c0, %c0_0] : memref<16x128xf32, #tpu.memory_space<vmem>>, vector<16x128xf32>
    %cst = arith.constant dense<0xFF800000> : vector<16xf32>
    %1 = vector.multi_reduction <maximumf>, %0, %cst [1] : vector<16x128xf32> to vector<16xf32>
    %2 = vector.shape_cast %1 : vector<16xf32> to vector<16x1xf32>
    %3 = vector.broadcast %2 : vector<16x1xf32> to vector<16x128xf32>
    %4 = arith.subf %0, %3 : vector<16x128xf32>
    %5 = math.exp %4 : vector<16x128xf32>
    %cst_1 = arith.constant dense<0.000000e+00> : vector<16xf32>
    %6 = vector.multi_reduction <add>, %5, %cst_1 [1] : vector<16x128xf32> to vector<16xf32>
    %7 = vector.shape_cast %6 : vector<16xf32> to vector<16x1xf32>
    %8 = math.log %7 : vector<16x1xf32>
    %9 = arith.addf %2, %8 : vector<16x1xf32>
    %c0_2 = arith.constant 0 : index
    %c0_3 = arith.constant 0 : index
    %10 = vector.load %arg2[%c0_2, %c0_3] : memref<16x1xi32, #tpu.memory_space<vmem>>, vector<16x1xi32>
    %c-1_i32 = arith.constant -1 : i32
    %11 = vector.broadcast %c-1_i32 : i32 to vector<16x1xi32>
    %12 = arith.cmpi eq, %10, %11 : vector<16x1xi32>
    %c0_i32 = arith.constant 0 : i32
    %13 = vector.broadcast %c0_i32 : i32 to vector<16x1xi32>
    %14 = arith.select %12, %13, %10 : vector<16x1xi1>, vector<16x1xi32>
    %15 = tpu.iota {dimensions = array<i32: 1>} : vector<16x128xi32>
    %16 = vector.broadcast %14 : vector<16x1xi32> to vector<16x128xi32>
    %17 = arith.cmpi eq, %15, %16 : vector<16x128xi32>
    %cst_4 = arith.constant 0.000000e+00 : f32
    %18 = vector.broadcast %cst_4 : f32 to vector<16x128xf32>
    %19 = arith.select %17, %0, %18 : vector<16x128xi1>, vector<16x128xf32>
    %cst_5 = arith.constant dense<0.000000e+00> : vector<16xf32>
    %20 = vector.multi_reduction <add>, %19, %cst_5 [1] : vector<16x128xf32> to vector<16xf32>
    %21 = vector.shape_cast %20 : vector<16xf32> to vector<16x1xf32>
    %cst_6 = arith.constant dense<0.000000e+00> : vector<16xf32>
    %22 = vector.multi_reduction <add>, %0, %cst_6 [1] : vector<16x128xf32> to vector<16xf32>
    %23 = vector.shape_cast %22 : vector<16xf32> to vector<16x1xf32>
    %cst_7 = arith.constant 7.87401571E-4 : f32
    %24 = vector.broadcast %cst_7 : f32 to vector<16x1xf32>
    %25 = arith.mulf %24, %23 : vector<16x1xf32>
    %cst_8 = arith.constant 0.899212599 : f32
    %26 = vector.broadcast %cst_8 : f32 to vector<16x1xf32>
    %27 = arith.mulf %26, %21 : vector<16x1xf32>
    %28 = arith.addf %25, %27 : vector<16x1xf32>
    %29 = arith.subf %28, %9 : vector<16x1xf32>
    %30 = tpu.iota {dimensions = array<i32: 0>} : vector<16x1xi32>
    %c16_i32 = arith.constant 16 : i32
    %31 = arith.muli %arg0, %c16_i32 : i32
    %32 = vector.broadcast %31 : i32 to vector<16x1xi32>
    %33 = arith.addi %32, %30 : vector<16x1xi32>
    %c16_i32_9 = arith.constant 16 : i32
    %34 = vector.broadcast %c16_i32_9 : i32 to vector<16x1xi32>
    %35 = arith.cmpi slt, %33, %34 : vector<16x1xi32>
    %cst_10 = arith.constant dense<true> : vector<16x1xi1>
    %36 = arith.xori %12, %cst_10 : vector<16x1xi1>
    %37 = arith.andi %36, %35 : vector<16x1xi1>
    %cst_11 = arith.constant -0.809501707 : f32
    %38 = vector.broadcast %cst_11 : f32 to vector<16x1xf32>
    %39 = arith.subf %38, %29 : vector<16x1xf32>
    %cst_12 = arith.constant 0.000000e+00 : f32
    %40 = vector.broadcast %cst_12 : f32 to vector<16x1xf32>
    %41 = arith.select %37, %39, %40 : vector<16x1xi1>, vector<16x1xf32>
    %cst_13 = arith.constant dense<0.000000e+00> : vector<1xf32>
    %42 = vector.multi_reduction <add>, %41, %cst_13 [0] : vector<16x1xf32> to vector<1xf32>
    %43 = vector.shape_cast %42 : vector<1xf32> to vector<1x1xf32>
    %44 = arith.extui %37 : vector<16x1xi1> to vector<16x1xi32>
    %45 = arith.sitofp %44 : vector<16x1xi32> to vector<16x1xf32>
    %cst_14 = arith.constant dense<0.000000e+00> : vector<1xf32>
    %46 = vector.multi_reduction <add>, %45, %cst_14 [0] : vector<16x1xf32> to vector<1xf32>
    %47 = vector.shape_cast %46 : vector<1xf32> to vector<1x1xf32>
    %48 = tpu.iota {dimensions = array<i32: 2>} : vector<1x1x2xi32>
    %c0_i32_15 = arith.constant 0 : i32
    %49 = vector.broadcast %c0_i32_15 : i32 to vector<1x1x2xi32>
    %50 = arith.cmpi eq, %48, %49 : vector<1x1x2xi32>
    %51 = vector.shape_cast %43 : vector<1x1xf32> to vector<1x1x1xf32>
    %52 = vector.shape_cast %47 : vector<1x1xf32> to vector<1x1x1xf32>
    %53 = vector.shape_cast %51 : vector<1x1x1xf32> to vector<1x1x1xf32>
    %54 = vector.broadcast %53 : vector<1x1x1xf32> to vector<1x1x2xf32>
    %55 = vector.shape_cast %52 : vector<1x1x1xf32> to vector<1x1x1xf32>
    %56 = vector.broadcast %55 : vector<1x1x1xf32> to vector<1x1x2xf32>
    %57 = arith.select %50, %54, %56 : vector<1x1x2xi1>, vector<1x1x2xf32>
    %58 = tpu.iota {dimensions = array<i32: 1>} : vector<1x8x2xi32>
    %c0_i32_16 = arith.constant 0 : i32
    %59 = vector.broadcast %c0_i32_16 : i32 to vector<1x8x2xi32>
    %60 = arith.cmpi eq, %58, %59 : vector<1x8x2xi32>
    %cst_17 = arith.constant 0.000000e+00 : f32
    %61 = vector.shape_cast %57 : vector<1x1x2xf32> to vector<1x1x2xf32>
    %62 = vector.broadcast %61 : vector<1x1x2xf32> to vector<1x8x2xf32>
    %63 = vector.broadcast %cst_17 : f32 to vector<1x8x2xf32>
    %64 = arith.select %60, %62, %63 : vector<1x8x2xi1>, vector<1x8x2xf32>
    %c0_18 = arith.constant 0 : index
    %c0_19 = arith.constant 0 : index
    %c0_20 = arith.constant 0 : index
    %65 = vector.load %arg3[%c0_18, %c0_19, %c0_20] : memref<1x8x2xf32, #tpu.memory_space<vmem>>, vector<1x8x2xf32>
    tpu.vector_store %arg3[%c0_18, %c0_19, %c0_20], %64 {strides = array<i32>} : memref<1x8x2xf32, #tpu.memory_space<vmem>>, vector<1x8x2xf32>,
    return
  }
  func.func @transform_0(%arg0: i32) -> (i32, i32) {
    %c0_i32 = arith.constant 0 : i32
    %c0_i32_0 = arith.constant 0 : i32
    return %arg0, %c0_i32 : i32, i32
  }
  func.func @transform_1(%arg0: i32) -> (i32, i32) {
    %c0_i32 = arith.constant 0 : i32
    %c0_i32_0 = arith.constant 0 : i32
    return %arg0, %c0_i32 : i32, i32
  }
  func.func @transform_2(%arg0: i32) -> (i32, i32, i32) {
    %c0_i32 = arith.constant 0 : i32
    %c0_i32_0 = arith.constant 0 : i32
    %c0_i32_1 = arith.constant 0 : i32
    return %arg0, %c0_i32, %c0_i32_0 : i32, i32, i32
  }
}

</mosaic_0001>

<llo_original>
// kernel: tpu_custom_call.1
$region0: #{tpu_custom_call.1}
  #allocation0 [shape = 'u32[]', space=smem, size = 0x4, offset = 0x4, fixed_abs, tag = 'smem constant byte address 0x4 - core index']
  #allocation1 [shape = 'u32[144,128]{1,0:T(1,128)}', space=vmem, size = 0x12000, scoped, tag = 'internal scratch']
  %s0 = inlined_call_operand.vmem [shape: f32[16,128], index: 0, kind: input, shape index: {}]
  %s1 = inlined_call_operand.vmem [shape: s32[16,1], index: 1, kind: input, shape index: {}]
  %s2 = inlined_call_operand.vmem [shape: f32[1,8,2], index: 2, kind: output, shape index: {}]
  %s3 = sld [smem:[#allocation0]]
  $region18: #{tpu_custom_call.1} parent=0
    _
  %s5 = ssub.s32 1, %s3
  %s6 = scalar_select 0, %s5, %s3
  // Predicated region
  $region2: #{tpu_custom_call.1} parent=0 // pred_check
    _
  $region3: #{tpu_custom_call.1} parent=0 // pred_check_branch
    %8 = sbr.rel (0) target = $region5
  $region4: #{tpu_custom_call.1} parent=0 // pred_region
    _
  $region5: #{tpu_custom_call.1} parent=0 // pred_fallthru
    _
  // Predicated region
  $region6: #{tpu_custom_call.1} parent=0 // pred_check
    _
  $region7: #{tpu_custom_call.1} parent=0 // pred_check_branch
    %10 = sbr.rel (0) target = $region9
  $region8: #{tpu_custom_call.1} parent=0 // pred_region
    _
  $region9: #{tpu_custom_call.1} parent=0 // pred_fallthru
    _
  %v11 = vld [vmem:[%s0] sm:$0xff]
  %v12 = vld [vmem:[%s0 + $0x8] sm:$0xff]
  %13 = vmax.xlane.f32.xlu0 %v11
  %v14 = vpop.xlane.xlu0 %13
  %15 = vmax.xlane.f32.xlu0 %v12
  %v16 = vpop.xlane.xlu0 %15
  %v17 = vsub.f32 %v11, %v14
  %v18 = vsub.f32 %v12, %v16
  %v19 = vmul.f32 %v17, 1.442695
  %v20 = vpow.pop %v19
  %v21 = vmul.f32 %v18, 1.442695
  %v22 = vpow.pop %v21
  %23 = vadd.xlane.f32.xlu0 %v20
  %v24 = vpop.xlane.xlu0 %23
  %25 = vadd.xlane.f32.xlu0 %v22
  %v26 = vpop.xlane.xlu0 %25
  %v27 = vlog2.pop %v24
  %v28 = vmul.f32 %v27, 0.6931472
  %v29 = vlog2.pop %v26
  %v30 = vmul.f32 %v29, 0.6931472
  %v31 = vadd.f32 %v14, %v28
  %v32 = vadd.f32 %v16, %v30
  %v33 = vld [vmem:[%s1] sm:$0xff]
  %v34 = vld [vmem:[%s1 + $0x8] sm:$0xff]
  %vm35 = vcmp.eq.s32.totalorder %v33, 4294967295
  %vm36 = vcmp.eq.s32.totalorder %v34, 4294967295
  %v37 = vsel %vm35, 0, %v33
  %v38 = vsel %vm36, 0, %v34
  %v39 = vlaneseq
  %v40 = vand.u32 %v39, 127
  %41 = vset.pattern.permute.xlu0 0
  %42 = vperm.xlu0 %41, %v37
  %v43 = vpop.permute.xlu0 %42
  %44 = vset.pattern.permute.xlu0 0
  %45 = vperm.xlu0 %44, %v38
  %v46 = vpop.permute.xlu0 %45
  %vm47 = vcmp.eq.s32.totalorder %v40, %v43
  %vm48 = vcmp.eq.s32.totalorder %v40, %v46
  %v49 = vsel %vm47, %v11, 0.0
  %v50 = vsel %vm48, %v12, 0.0
  %51 = vadd.xlane.f32.xlu0 %v49
  %v52 = vpop.xlane.xlu0 %51
  %53 = vadd.xlane.f32.xlu0 %v50
  %v54 = vpop.xlane.xlu0 %53
  %55 = vadd.xlane.f32.xlu0 %v11
  %v56 = vpop.xlane.xlu0 %55
  %57 = vadd.xlane.f32.xlu0 %v12
  %v58 = vpop.xlane.xlu0 %57
  %v59 = vmul.f32 %v56, 0.0007874016
  %v60 = vmul.f32 %v58, 0.0007874016
  %v61 = vmul.f32 %v52, 0.8992126
  %v62 = vmul.f32 %v54, 0.8992126
  %v63 = vadd.f32 %v59, %v61
  %v64 = vadd.f32 %v60, %v62
  %v65 = vsub.f32 %v63, %v31
  %v66 = vsub.f32 %v64, %v32
  %v67 = vlaneseq
  %v68 = vshrl.u32 %v67, 7
  %v69 = vadd.s32 %v68, 8
  %s70 = smul.u32 0, 16
  %v71 = vstv %s70
  %v72 = vadd.s32 %v71, %v68
  %v73 = vadd.s32 %v71, %v69
  %vm74 = vcmp.lt.s32.totalorder %v72, 16
  %vm75 = vcmp.lt.s32.totalorder %v73, 16
  %vm76 = vmxor %vm35, 1
  %vm77 = vmxor %vm36, 1
  %vm78 = vmand %vm76, %vm74
  %vm79 = vmand %vm77, %vm75
  %v80 = vsub.f32 -0.8095017, %v65
  %v81 = vsub.f32 -0.8095017, %v66
  %v82 = vsel %vm78, %v80, 0.0
  %v83 = vsel %vm79, %v81, 0.0
  %vm84 = vcmask 7168
  %v85 = vsel %vm84, %v82, 0.0
  %v86 = vsel %vm84, %v83, 0.0
  %v87 = vadd.f32 %v85, %v86
  %v88 = vrot.slane %v87, 4
  %v89 = vadd.f32 %v87, %v88
  %v90 = vrot.slane %v89, 2
  %v91 = vadd.f32 %v89, %v90
  %v92 = vrot.slane %v91, 1
  %v93 = vadd.f32 %v91, %v92
  %v94 = vsel %vm78, 1, 0
  %v95 = vsel %vm79, 1, 0
  %v96 = vcvt.s32.f32 %v94
  %v97 = vcvt.s32.f32 %v95
  %v98 = vsel %vm84, %v96, 0.0
  %v99 = vsel %vm84, %v97, 0.0
  %v100 = vadd.f32 %v98, %v99
  %v101 = vrot.slane %v100, 4
  %v102 = vadd.f32 %v100, %v101
  %v103 = vrot.slane %v102, 2
  %v104 = vadd.f32 %v102, %v103
  %v105 = vrot.slane %v104, 1
  %v106 = vadd.f32 %v104, %v105
  %vm107 = vcmp.eq.s32.totalorder %v40, 0
  %109 = vset.pattern.permute.xlu0 0
  %110 = vperm.xlu0 %109, %v93
  %v111 = vpop.permute.xlu0 %110
  %114 = vset.pattern.permute.xlu0 0
  %115 = vperm.xlu0 %114, %v106
  %v116 = vpop.permute.xlu0 %115
  %v118 = vsel %vm107, %v111, %v116
  %vm119 = vcmp.eq.s32.totalorder %v68, 0
  %v120 = vsel %vm119, %v118, 0.0
  %vm121 = vcmask 15360
  %122 = vst.msk [vmem:[%s2] sm:$0xff] %vm121, %v120
  // Predicated region
  $region10: #{tpu_custom_call.1} parent=0 // pred_check
    _
  $region11: #{tpu_custom_call.1} parent=0 // pred_check_branch
    %124 = sbr.rel (0) target = $region13
  $region12: #{tpu_custom_call.1} parent=0 // pred_region
    _
  $region13: #{tpu_custom_call.1} parent=0 // pred_fallthru
    _
  // Predicated region
  $region14: #{tpu_custom_call.1} parent=0 // pred_check
    _
  $region15: #{tpu_custom_call.1} parent=0 // pred_check_branch
    %126 = sbr.rel (0) target = $region17
  $region16: #{tpu_custom_call.1} parent=0 // pred_region
    _
  $region17: #{tpu_custom_call.1} parent=0 // pred_fallthru
    _

</llo_original>
